<compile_context>
chip_gen: v7x
topology: tpu7x:2x2x1
jax: 0.10.0
libtpu: 0.0.40
codegen_flags: <defaults>
</compile_context>

<pallas_src>
import functools

import jax
import jax.numpy as jnp
from jax import lax
from jax.experimental import pallas as pl
from jax.experimental.pallas import tpu as pltpu


def _vmem_budget_bytes():
    """Per-generation VMEM budget (bytes) with headroom for pipelining."""
    cap = 64 * 1024 * 1024  # conservative default = v7x physical VMEM per TC
    try:
        info = pltpu.get_tpu_info()
        cap = int(getattr(info, "vmem_capacity_bytes", cap))
    except Exception:
        pass
    # ~3/4 of physical: ~48 MiB on v7x (64 MiB), ~96 MiB on v5e/v6e (128 MiB).
    return (cap * 3) // 4


# ---------------------------------------------------------------------------
# Fused kernel (primary path): one grid step per batch, x_b resident in VMEM.
# ---------------------------------------------------------------------------
def _fused_kernel(x_ref, o_ref, *, inv_temp):
    xb = x_ref[0].astype(jnp.bfloat16)                           # (d, Np)
    # Gram = x_b @ x_b^T, contracted over the (lane-dense) spatial axis.
    gram = lax.dot_general(xb, xb, (((1,), (1,)), ((), ())),
                           preferred_element_type=jnp.float32)   # (d, d)
    logits = gram * inv_temp
    logits = logits - jnp.max(logits, axis=-1, keepdims=True)
    p = jnp.exp(logits)
    denom = jnp.sum(p, axis=-1, keepdims=True)
    attn = (p * pl.reciprocal(denom, approx=True)).astype(jnp.bfloat16)
    o_ref[0] = jnp.dot(attn, xb,
                       preferred_element_type=jnp.float32).astype(o_ref.dtype)


# ---------------------------------------------------------------------------
# Fallback path (x_b too large for residency): two tiled, pipelined calls.
# ---------------------------------------------------------------------------
def _gram_softmax_kernel(x_ref, attn_ref, acc_ref, *, inv_temp):
    t = pl.program_id(1)

    @pl.when(t == 0)
    def _():
        acc_ref[...] = jnp.zeros_like(acc_ref)

    xt = x_ref[0].astype(jnp.bfloat16)                           # (d, TN)
    acc_ref[...] += lax.dot_general(
        xt, xt, (((1,), (1,)), ((), ())),
        preferred_element_type=jnp.float32)                      # (d, d)

    @pl.when(t == pl.num_programs(1) - 1)
    def _():
        logits = acc_ref[...] * inv_temp
        logits = logits - jnp.max(logits, axis=-1, keepdims=True)
        p = jnp.exp(logits)
        denom = jnp.sum(p, axis=-1, keepdims=True)
        attn_ref[0] = (p * pl.reciprocal(denom, approx=True)
                       ).astype(attn_ref.dtype)                  # bf16 out


def _apply_kernel(attn_ref, x_ref, o_ref):
    a = attn_ref[0]                                              # (d, d) bf16
    v = x_ref[0].astype(jnp.bfloat16)                            # (d, TN)
    o_ref[0] = jnp.dot(a, v,
                       preferred_element_type=jnp.float32).astype(o_ref.dtype)


def _pick_tile(n_pad, d, budget_bytes, max_tile=4096):
    """Largest multiple of 128 dividing n_pad, bounded by the VMEM budget."""
    # The apply kernel holds double-buffered (d, TN) f32 input + output blocks
    # plus bf16 temporaries -> keep ~20*d*TN bytes under the budget.
    cap = max(128, min(max_tile, (budget_bytes // (20 * d)) // 128 * 128))
    best = 128
    t = 128
    while t <= min(n_pad, cap):
        if n_pad % t == 0:
            best = t
        t += 128
    return best


def sdpa_forward(x_nchw, temperature):
    """x_nchw: (B, d, H, W). Returns (B, d, H, W), same dtype."""
    B, d, H, W = x_nchw.shape
    N = H * W
    x = x_nchw.reshape(B, d, N)                  # free view, no transpose

    # Pad N to a lane-dense multiple of 128 (exact: zero columns add nothing
    # to the Gram and produce zero output columns we slice off).
    Np = max(128, ((N + 127) // 128) * 128)
    if Np != N:
        x = jnp.pad(x, ((0, 0), (0, 0), (0, Np - N)))

    inv_temp = 1.0 / float(temperature) ** 0.5
    budget = _vmem_budget_bytes()
    out_dtype = x_nchw.dtype

    # Fused/resident-x path: double-buffered f32 input + output blocks plus
    # bf16/transpose temporaries -> ~24 * d * Np bytes of VMEM.
    if 24 * d * Np <= budget:
        out = pl.pallas_call(
            functools.partial(_fused_kernel, inv_temp=inv_temp),
            out_shape=jax.ShapeDtypeStruct((B, d, Np), out_dtype),
            grid_spec=pltpu.PrefetchScalarGridSpec(
                num_scalar_prefetch=0,
                grid=(B,),
                in_specs=[pl.BlockSpec((1, d, Np), lambda b: (b, 0, 0))],
                out_specs=pl.BlockSpec((1, d, Np), lambda b: (b, 0, 0)),
            ),
            compiler_params=pltpu.CompilerParams(
                dimension_semantics=("parallel",),
                vmem_limit_bytes=budget),
        )(x)
    else:
        TN = _pick_tile(Np, d, budget)
        n_t = Np // TN

        attn = pl.pallas_call(
            functools.partial(_gram_softmax_kernel, inv_temp=inv_temp),
            out_shape=jax.ShapeDtypeStruct((B, d, d), jnp.bfloat16),
            grid_spec=pltpu.PrefetchScalarGridSpec(
                num_scalar_prefetch=0,
                grid=(B, n_t),
                in_specs=[pl.BlockSpec((1, d, TN), lambda b, t: (b, 0, t))],
                out_specs=pl.BlockSpec((1, d, d), lambda b, t: (b, 0, 0)),
                scratch_shapes=[pltpu.VMEM((d, d), jnp.float32)],
            ),
            compiler_params=pltpu.CompilerParams(
                dimension_semantics=("parallel", "arbitrary"),
                vmem_limit_bytes=budget),
        )(x)

        out = pl.pallas_call(
            _apply_kernel,
            out_shape=jax.ShapeDtypeStruct((B, d, Np), out_dtype),
            grid_spec=pltpu.PrefetchScalarGridSpec(
                num_scalar_prefetch=0,
                grid=(B, n_t),
                in_specs=[pl.BlockSpec((1, d, d), lambda b, t: (b, 0, 0)),
                          pl.BlockSpec((1, d, TN), lambda b, t: (b, 0, t))],
                out_specs=pl.BlockSpec((1, d, TN), lambda b, t: (b, 0, t)),
            ),
            compiler_params=pltpu.CompilerParams(
                dimension_semantics=("parallel", "parallel"),
                vmem_limit_bytes=budget),
        )(attn, x)

    if Np != N:
        out = out[:, :, :N]
    return out.reshape(B, d, H, W)


def sdpa_reference(x_nchw, temperature):
    """Pure-JAX f32 reference mirroring the PyTorch forward (eval, mask=None)."""
    B, d, H, W = x_nchw.shape
    N = H * W
    x = x_nchw.reshape(B, d, N).astype(jnp.float32)
    q = x / (float(temperature) ** 0.5)
    attn = jnp.einsum('bdn,ben->bde', q, x)
    attn = jax.nn.softmax(attn, axis=-1)
    out = jnp.einsum('bde,ben->bdn', attn, x)
    return out.reshape(B, d, H, W).astype(x_nchw.dtype)


if __name__ == "__main__":
    key = jax.random.PRNGKey(0)
    k1, k2 = jax.random.split(key)

    # Case 1: lane-aligned spatial size (fused resident-x path).
    B, d, H, W = 2, 32, 16, 16
    N = H * W
    # temperature is a module hyperparameter; N**2 keeps the softmax logits
    # O(1) (non-degenerate) for random normal test inputs.
    temperature = float(N) ** 2
    x1 = jax.random.normal(k1, (B, d, H, W), dtype=jnp.float32)
    out1 = jax.block_until_ready(sdpa_forward(x1, temperature))
    ref1 = sdpa_reference(x1, temperature)
    assert out1.shape == (B, d, H, W)
    # bf16 MXU operands with f32 accumulation -> bf16-level tolerance.
    assert jnp.allclose(out1, ref1, atol=2e-2, rtol=2e-2), (
        f"case1 mismatch vs reference, max abs diff = "
        f"{float(jnp.max(jnp.abs(out1 - ref1)))}")

    # Case 2: N not a multiple of 128 (exercises the zero-padding path).
    B2, d2, H2, W2 = 1, 32, 10, 10
    temperature2 = float(H2 * W2) ** 2
    x2 = jax.random.normal(k2, (B2, d2, H2, W2), dtype=jnp.float32)
    out2 = jax.block_until_ready(sdpa_forward(x2, temperature2))
    ref2 = sdpa_reference(x2, temperature2)
    assert out2.shape == (B2, d2, H2, W2)
    assert jnp.allclose(out2, ref2, atol=2e-2, rtol=2e-2), (
        f"case2 mismatch vs reference, max abs diff = "
        f"{float(jnp.max(jnp.abs(out2 - ref2)))}")

    print("KERNEL_OK")
</pallas_src>

<mosaic_0001>
module attributes {stable_mosaic.version = 11 : i64} {
  func.func @_fused_kernel(%arg0: i32, %arg1: memref<1x32x256xf32, #tpu.memory_space<vmem>>, %arg2: memref<1x32x256xf32, #tpu.memory_space<vmem>>) attributes {dimension_semantics = [#tpu.dimension_semantics<parallel>], iteration_bounds = array<i64: 2>, scalar_prefetch = 0 : i64, scratch_operands = 0 : i64, tpu.core_type = #tpu.core_type<tc>, window_params = [{transform_indices = @transform_0, window_bounds = array<i64: 1, 32, 256>}, {transform_indices = @transform_1, window_bounds = array<i64: 1, 32, 256>}]} {
    %c0 = arith.constant 0 : index
    %c0_0 = arith.constant 0 : index
    %c0_1 = arith.constant 0 : index
    %0 = vector.load %arg1[%c0, %c0_0, %c0_1] : memref<1x32x256xf32, #tpu.memory_space<vmem>>, vector<1x32x256xf32>
    %1 = vector.shape_cast %0 : vector<1x32x256xf32> to vector<32x256xf32>
    %2 = arith.truncf %1 : vector<32x256xf32> to vector<32x256xbf16>
    %cst = arith.constant dense<0.000000e+00> : vector<32x32xf32>
    %3 = tpu.matmul %2, %2, %cst {dimension_numbers = #tpu.dot_dimension_numbers<[1], [1], [0], [0], [0, 0, 1, 0], [], []>} : vector<32x256xbf16>, vector<32x256xbf16>, vector<32x32xf32> -> vector<32x32xf32>
    %cst_2 = arith.constant 3.906250e-03 : f32
    %4 = vector.broadcast %cst_2 : f32 to vector<32x32xf32>
    %5 = arith.mulf %3, %4 : vector<32x32xf32>
    %cst_3 = arith.constant dense<0xFF800000> : vector<32xf32>
    %6 = vector.multi_reduction <maximumf>, %5, %cst_3 [1] : vector<32x32xf32> to vector<32xf32>
    %7 = vector.shape_cast %6 : vector<32xf32> to vector<32x1xf32>
    %8 = vector.broadcast %7 : vector<32x1xf32> to vector<32x32xf32>
    %9 = arith.subf %5, %8 : vector<32x32xf32>
    %10 = math.exp %9 : vector<32x32xf32>
    %cst_4 = arith.constant dense<0.000000e+00> : vector<32xf32>
    %11 = vector.multi_reduction <add>, %10, %cst_4 [1] : vector<32x32xf32> to vector<32xf32>
    %12 = vector.shape_cast %11 : vector<32xf32> to vector<32x1xf32>
    %13 = tpu.reciprocal %12 {approx = true} : vector<32x1xf32> -> vector<32x1xf32>
    %14 = vector.broadcast %13 : vector<32x1xf32> to vector<32x32xf32>
    %15 = arith.mulf %10, %14 : vector<32x32xf32>
    %16 = arith.truncf %15 : vector<32x32xf32> to vector<32x32xbf16>
    %cst_5 = arith.constant dense<0.000000e+00> : vector<32x256xf32>
    %17 = tpu.matmul %16, %2, %cst_5 {dimension_numbers = #tpu.dot_dimension_numbers<[1], [0], [0], [1], [0, 0, 1, 1], [], []>} : vector<32x32xbf16>, vector<32x256xbf16>, vector<32x256xf32> -> vector<32x256xf32>
    %c0_6 = arith.constant 0 : index
    %c0_7 = arith.constant 0 : index
    %c0_8 = arith.constant 0 : index
    %18 = vector.load %arg2[%c0_6, %c0_7, %c0_8] : memref<1x32x256xf32, #tpu.memory_space<vmem>>, vector<1x32x256xf32>
    %19 = vector.shape_cast %18 : vector<1x32x256xf32> to vector<32x256xf32>
    %20 = vector.shape_cast %17 : vector<32x256xf32> to vector<1x32x256xf32>
    tpu.vector_store %arg2[%c0_6, %c0_7, %c0_8], %20 {strides = array<i32>} : memref<1x32x256xf32, #tpu.memory_space<vmem>>, vector<1x32x256xf32>,
    return
  }
  func.func @transform_0(%arg0: i32) -> (i32, i32, i32) {
    %c0_i32 = arith.constant 0 : i32
    %c0_i32_0 = arith.constant 0 : i32
    %c0_i32_1 = arith.constant 0 : i32
    return %arg0, %c0_i32, %c0_i32_0 : i32, i32, i32
  }
  func.func @transform_1(%arg0: i32) -> (i32, i32, i32) {
    %c0_i32 = arith.constant 0 : i32
    %c0_i32_0 = arith.constant 0 : i32
    %c0_i32_1 = arith.constant 0 : i32
    return %arg0, %c0_i32, %c0_i32_0 : i32, i32, i32
  }
}

</mosaic_0001>

<llo_original>
// kernel: tpu_custom_call.1
$region0: #{tpu_custom_call.1}
  #allocation0 [shape = 'u32[]', space=smem, size = 0x4, offset = 0x4, fixed_abs, tag = 'smem constant byte address 0x4 - core index']
  #allocation1 [shape = 'u32[144,128]{1,0:T(1,128)}', space=vmem, size = 0x12000, scoped, tag = 'internal scratch']
  %s0 = inlined_call_operand.hbm [shape: f32[2,32,256], index: 0, kind: input, shape index: {}]
  %s1 = inlined_call_operand.hbm [shape: f32[2,32,256], index: 1, kind: output, shape index: {}]
  %s2 = sld [smem:[#allocation0]]
  $region41: #{tpu_custom_call.1} parent=0
    _
  %s4 = ssub.s32 1, %s2
  %s5 = scalar_select 0, %s4, %s2
  $region1: #{tpu_custom_call.1} parent=0
    #allocation2 [shape = 'u8[65536]{0}', space=vmem, size = 0x10000, scoped, tag = 'input window, operand 0']
    #allocation3 [shape = 's32[2]{0}', space=sflag, size = 0x8, scoped, tag = 'scoped memory for tpu_custom_call.1']
    #allocation4 [shape = 's32[2]{0}', space=sflag, size = 0x8, scoped, tag = 'scoped memory for tpu_custom_call.1']
    #allocation5 [shape = 'u8[65536]{0}', space=vmem, size = 0x10000, scoped, tag = 'output window, operand 0']
    %6 = vsyncpa [#allocation3], 0
    %s7 = scalar_lea.sflag [#allocation3], 1
    %8 = vsyncpa %s7, 0
    %9 = vsyncpa [#allocation4], 0
    %s10 = scalar_lea.sflag [#allocation4], 1
    %11 = vsyncpa %s10, 0
    loop: start=0, step=1, limit=4
    $region2: #{tpu_custom_call.1} parent=1 // loop_pre_header
      _
    $region3: #{tpu_custom_call.1} parent=1 // loop_header
      %s13 = sphi 0, %s17
      %p14 = scmp.ge.s32.totalorder %s13, 4
      %s23 = sphi 0, %s25
      %s26 = sphi 0, %s23
      %s27 = sphi 0, %s26
      %s43 = sphi 0, %s27
      %s49 = sphi 0, %s51
      %s52 = sphi 0, %s49
      %s53 = sphi 0, %s52
      %s69 = sphi 0, %s53
    $region4: #{tpu_custom_call.1} parent=1 // loop_header_branch
      %16 = sbr.rel (%p14) target = $region8
    $region5: #{tpu_custom_call.1} parent=1 // loop_body
      %s18 = ssub.s32 %s13, 1
      %s19 = ssub.s32 %s13, 2
      %s20 = sadd.s32 %s13, 1
      %s21 = ssub.s32 %s13, %s20
      %p22 = scmp.eq.s32.totalorder %s21, 0
      %s24 = sadd.s32 %s23, 1
      %s25 = scalar_select %p22, %s23, %s24
      %p28 = pneg %p22
      %p29 = scmp.eq.s32.totalorder %s13, 1
      %p30 = por %p28, %p29
      %p31 = scmp.ne.s32.totalorder %s23, %s26
      %p32 = scmp.eq.s32.totalorder %s13, 0
      %p33 = por %p31, %p32
      %p34 = scmp.ne.s32.totalorder %s23, %s26
      %p35 = scmp.eq.s32.totalorder %s18, 1
      %p36 = por %p34, %p35
      %p37 = scmp.ne.s32.totalorder %s26, %s27
      %p38 = scmp.eq.s32.totalorder %s18, 0
      %p39 = por %p37, %p38
      %p40 = scmp.ne.s32.totalorder %s26, %s27
      %p41 = scmp.eq.s32.totalorder %s19, 1
      %p42 = por %p40, %p41
      %p44 = scmp.ne.s32.totalorder %s27, %s43
      %p45 = scmp.eq.s32.totalorder %s19, 0
      %p46 = por %p44, %p45
      %s47 = ssub.s32 %s13, %s20
      %p48 = scmp.eq.s32.totalorder %s47, 0
      %s50 = sadd.s32 %s49, 1
      %s51 = scalar_select %p48, %s49, %s50
      %p54 = pneg %p48
      %p55 = scmp.eq.s32.totalorder %s13, 1
      %p56 = por %p54, %p55
      %p57 = scmp.ne.s32.totalorder %s49, %s52
      %p58 = scmp.eq.s32.totalorder %s13, 0
      %p59 = por %p57, %p58
      %p60 = scmp.ne.s32.totalorder %s49, %s52
      %p61 = scmp.eq.s32.totalorder %s18, 1
      %p62 = por %p60, %p61
      %p63 = scmp.ne.s32.totalorder %s52, %s53
      %p64 = scmp.eq.s32.totalorder %s18, 0
      %p65 = por %p63, %p64
      %p66 = scmp.ne.s32.totalorder %s52, %s53
      %p67 = scmp.eq.s32.totalorder %s19, 1
      %p68 = por %p66, %p67
      %p70 = scmp.ne.s32.totalorder %s53, %s69
      %p71 = scmp.eq.s32.totalorder %s19, 0
      %p72 = por %p70, %p71
      %p73 = scmp.le.s32.totalorder 1, %s13
      %p74 = scmp.lt.s32.totalorder %s13, 3
      %p75 = pnand %p73, %p74
      %p76 = pneg %p75
      // Predicated region
      $region9: #{tpu_custom_call.1} parent=5 // pred_check
        _
      $region10: #{tpu_custom_call.1} parent=5 // pred_check_branch
        %78 = sbr.rel (%p75) target = $region12
      $region11: #{tpu_custom_call.1} parent=5 // pred_region
        %s79 = ssub.s32 %s13, 1
      $region12: #{tpu_custom_call.1} parent=5 // pred_fallthru
        _
      %p80 = scmp.lt.s32.totalorder %s13, 2
      // Predicated region
      $region13: #{tpu_custom_call.1} parent=5 // pred_check
        %p81 = pneg %p80
      $region14: #{tpu_custom_call.1} parent=5 // pred_check_branch
        %83 = sbr.rel (%p81) target = $region16
      $region15: #{tpu_custom_call.1} parent=5 // pred_region
        // Predicated region
        $region17: #{tpu_custom_call.1} parent=15 // pred_check
          %p84 = pneg %p33
        $region18: #{tpu_custom_call.1} parent=15 // pred_check_branch
          %86 = sbr.rel (%p84) target = $region20
        $region19: #{tpu_custom_call.1} parent=15 // pred_region
          %s87 = sand.u32 %s23, 1
          %s88 = scalar_lea.sflag [#allocation3], %s87
          %s89 = sand.u32 %s23, 1
          %s90 = smul.addr %s89, 64
          %s91 = scalar_lea.vmem [#allocation2], %s90
          %s93 = ssub.s32 1024, 1024
          %94 = vsyncadd %s88, %s93
          %s95 = smul.addr %s13, 8
          %s96 = smul.addr %s95, 128
          %s97 = scalar_lea.hbm %s0, %s96
          %s98 = sshll.u32 %s91, 4
          %s99 = int_to_ptr.vmem [resolvable:$true] %s98
          %104 = dma.hbm_to_vmem [thread:$0]  %s97, 1024, %s99, %s88, 256, 256, 16
        $region20: #{tpu_custom_call.1} parent=15 // pred_fallthru
          _
      $region16: #{tpu_custom_call.1} parent=5 // pred_fallthru
        _
      %p105 = scmp.le.s32.totalorder 1, %s13
      %p106 = scmp.lt.s32.totalorder %s13, 3
      %p107 = pnand %p105, %p106
      %p108 = pneg %p107
      // Predicated region
      $region21: #{tpu_custom_call.1} parent=5 // pred_check
        _
      $region22: #{tpu_custom_call.1} parent=5 // pred_check_branch
        %110 = sbr.rel (%p107) target = $region24
      $region23: #{tpu_custom_call.1} parent=5 // pred_region
        %s111 = ssub.s32 %s13, 1
        %s112 = sand.u32 %s26, 1
        %s113 = scalar_lea.sflag [#allocation3], %s112
        %s114 = sand.u32 %s26, 1
        %s115 = smul.addr %s114, 64
        %s116 = scalar_lea.vmem [#allocation2], %s115
        // Predicated region
        $region25: #{tpu_custom_call.1} parent=23 // pred_check
          %p117 = pneg %p39
        $region26: #{tpu_custom_call.1} parent=23 // pred_check_branch
          %119 = sbr.rel (%p117) target = $region28
        $region27: #{tpu_custom_call.1} parent=23 // pred_region
          %120 = dma.done %s113, 1024
        $region28: #{tpu_custom_call.1} parent=23 // pred_fallthru
          _
        %s121 = sand.u32 %s26, 1
        %s122 = scalar_lea.sflag [#allocation3], %s121
        %s123 = sand.u32 %s26, 1
        %s124 = smul.addr %s123, 64
        %s125 = scalar_lea.vmem [#allocation2], %s124
        %p126 = pneg %p39
        %p127 = pneg %p36
        %p128 = pneg %p65
        %p129 = pneg %p62
        %s130 = sand.u32 %s52, 1
        %s131 = scalar_lea.sflag [#allocation4], %s130
        %s132 = sand.u32 %s52, 1
        %s133 = smul.addr %s132, 64
        %s134 = scalar_lea.vmem [#allocation5], %s133
        %v136 = vld [vmem:[%s116] sm:$0xff]
        %v137 = vld [vmem:[%s116 + $0x8] sm:$0xff]
        %v138 = vld [vmem:[%s116 + $0x10] sm:$0xff]
        %v139 = vld [vmem:[%s116 + $0x18] sm:$0xff]
        %v140 = vld [vmem:[%s116 + $0x20] sm:$0xff]
        %v141 = vld [vmem:[%s116 + $0x28] sm:$0xff]
        %v142 = vld [vmem:[%s116 + $0x30] sm:$0xff]
        %v143 = vld [vmem:[%s116 + $0x38] sm:$0xff]
        %v144 = vpack.c.bf16 %v138, %v136
        %v145 = vpack.c.bf16 %v139, %v137
        %v146 = vpack.c.bf16 %v142, %v140
        %v147 = vpack.c.bf16 %v143, %v141
        %148 = vmatprep.subr.bf16.mxu0 %v145
        %149 = vmatpush1.bf16.xpose.msra.mxu0 %v144
        %150 = vmatprep.subr.bf16.mxu0 %v147
        %151 = vmatpush1.bf16.xpose.msra.mxu0 %v146
        %152 = vmatprep.subr.bf16.mxu0 0
        %153 = vmatpush1.bf16.xpose.msra.mxu0 0
        %154 = vmatprep.subr.bf16.mxu0 0
        %155 = vmatpush1.bf16.xpose.msra.mxu0 0
        %156 = vmatprep.subr.bf16.mxu0 0
        %157 = vmatpush1.bf16.xpose.msra.mxu0 0
        %158 = vmatprep.subr.bf16.mxu0 0
        %159 = vmatpush1.bf16.xpose.msra.mxu0 0
        %160 = vmatprep.subr.bf16.mxu0 0
        %161 = vmatpush1.bf16.xpose.msra.mxu0 0
        %162 = vmatprep.subr.bf16.mxu0 0
        %163 = vmatpush1.bf16.xpose.msra.mxu0 0
        %164 = vmatprep.subr.bf16.mxu0 0
        %165 = vmatpush1.bf16.xpose.msra.mxu0 0
        %166 = vmatprep.subr.bf16.mxu0 0
        %167 = vmatpush1.bf16.xpose.msra.mxu0 0
        %168 = vmatprep.subr.bf16.mxu0 0
        %169 = vmatpush1.bf16.xpose.msra.mxu0 0
        %170 = vmatprep.subr.bf16.mxu0 0
        %171 = vmatpush1.bf16.xpose.msra.mxu0 0
        %172 = vmatprep.subr.bf16.mxu0 0
        %173 = vmatpush1.bf16.xpose.msra.mxu0 0
        %174 = vmatprep.subr.bf16.mxu0 0
        %175 = vmatpush1.bf16.xpose.msra.mxu0 0
        %176 = vmatprep.subr.bf16.mxu0 0
        %177 = vmatpush1.bf16.xpose.msra.mxu0 0
        %178 = vmatprep.subr.bf16.mxu0 0
        %179 = vmatpush1.bf16.xpose.msra.mxu0 0
        %180 = vmatprep.mubr.bf16.mxu0 %v145
        %181 = vmatmul.mubr.bf16.gmra.mrb[0].mxu0 %v144
        %v182 = vpop.f32.mrb[0].mxu0
        %v183 = vadd.f32 0.0, %v182
        %v184 = vpop.f32.mrb[0].mxu0
        %v185 = vpop.f32.mrb[0].mxu0
        %v186 = vadd.f32 0.0, %v185
        %v187 = vpop.f32.mrb[0].mxu0
        %188 = vmatprep.mubr.bf16.mxu0 %v147
        %189 = vmatmul.mubr.bf16.gmra.mrb[0].mxu0 %v146
        %v190 = vpop.f32.mrb[0].mxu0
        %v191 = vadd.f32 0.0, %v190
        %v192 = vpop.f32.mrb[0].mxu0
        %v193 = vpop.f32.mrb[0].mxu0
        %v194 = vadd.f32 0.0, %v193
        %v195 = vpop.f32.mrb[0].mxu0
        %196 = vdwg.mxu0
        %v197 = vmul.f32 %v183, 0.00390625
        %v198 = vmul.f32 %v186, 0.00390625
        %v199 = vmul.f32 %v191, 0.00390625
        %v200 = vmul.f32 %v194, 0.00390625
        %vm201 = vcmask 261120
        %v202 = vsel %vm201, %v197, -inf
        %203 = vmax.xlane.f32.xlu0 %v202
        %v204 = vpop.xlane.xlu0 %203
        %v205 = vsel %vm201, %v198, -inf
        %206 = vmax.xlane.f32.xlu0 %v205
        %v207 = vpop.xlane.xlu0 %206
        %v208 = vsel %vm201, %v199, -inf
        %209 = vmax.xlane.f32.xlu0 %v208
        %v210 = vpop.xlane.xlu0 %209
        %v211 = vsel %vm201, %v200, -inf
        %212 = vmax.xlane.f32.xlu0 %v211
        %v213 = vpop.xlane.xlu0 %212
        %v214 = vsub.f32 %v197, %v204
        %v215 = vsub.f32 %v198, %v207
        %v216 = vsub.f32 %v199, %v210
        %v217 = vsub.f32 %v200, %v213
        %v218 = vmul.f32 %v214, 1.442695
        %v219 = vpow.pop %v218
        %v220 = vmul.f32 %v215, 1.442695
        %v221 = vpow.pop %v220
        %v222 = vmul.f32 %v216, 1.442695
        %v223 = vpow.pop %v222
        %v224 = vmul.f32 %v217, 1.442695
        %v225 = vpow.pop %v224
        %v226 = vsel %vm201, %v219, 0.0
        %227 = vadd.xlane.f32.xlu0 %v226
        %v228 = vpop.xlane.xlu0 %227
        %v229 = vsel %vm201, %v221, 0.0
        %230 = vadd.xlane.f32.xlu0 %v229
        %v231 = vpop.xlane.xlu0 %230
        %v232 = vsel %vm201, %v223, 0.0
        %233 = vadd.xlane.f32.xlu0 %v232
        %v234 = vpop.xlane.xlu0 %233
        %v235 = vsel %vm201, %v225, 0.0
        %236 = vadd.xlane.f32.xlu0 %v235
        %v237 = vpop.xlane.xlu0 %236
        %v238 = vrcp.pop %v228
        %v239 = vrcp.pop %v231
        %v240 = vrcp.pop %v234
        %v241 = vrcp.pop %v237
        %v242 = vmul.f32 %v219, %v238
        %v243 = vmul.f32 %v221, %v239
        %v244 = vmul.f32 %v223, %v240
        %v245 = vmul.f32 %v225, %v241
        %v246 = vpack.c.bf16 %v243, %v242
        %v247 = vpack.c.bf16 %v245, %v244
        %v249 = vsel %vm201, %v246, 0
        %v252 = vsel %vm201, %v247, 0
        %254 = vmatprep.subr.bf16.mxu0 %v145
        %255 = vmatpush1.bf16.msra.mxu0 %v144
        %256 = vmatprep.subr.bf16.mxu0 %v147
        %257 = vmatpush1.bf16.msra.mxu0 %v146
        %258 = vmatprep.subr.bf16.mxu0 0
        %259 = vmatpush1.bf16.msra.mxu0 0
        %260 = vmatprep.subr.bf16.mxu0 0
        %261 = vmatpush1.bf16.msra.mxu0 0
        %262 = vmatprep.subr.bf16.mxu0 0
        %263 = vmatpush1.bf16.msra.mxu0 0
        %264 = vmatprep.subr.bf16.mxu0 0
        %265 = vmatpush1.bf16.msra.mxu0 0
        %266 = vmatprep.subr.bf16.mxu0 0
        %267 = vmatpush1.bf16.msra.mxu0 0
        %268 = vmatprep.subr.bf16.mxu0 0
        %269 = vmatpush1.bf16.msra.mxu0 0
        %270 = vmatprep.subr.bf16.mxu0 0
        %271 = vmatpush1.bf16.msra.mxu0 0
        %272 = vmatprep.subr.bf16.mxu0 0
        %273 = vmatpush1.bf16.msra.mxu0 0
        %274 = vmatprep.subr.bf16.mxu0 0
        %275 = vmatpush1.bf16.msra.mxu0 0
        %276 = vmatprep.subr.bf16.mxu0 0
        %277 = vmatpush1.bf16.msra.mxu0 0
        %278 = vmatprep.subr.bf16.mxu0 0
        %279 = vmatpush1.bf16.msra.mxu0 0
        %280 = vmatprep.subr.bf16.mxu0 0
        %281 = vmatpush1.bf16.msra.mxu0 0
        %282 = vmatprep.subr.bf16.mxu0 0
        %283 = vmatpush1.bf16.msra.mxu0 0
        %284 = vmatprep.subr.bf16.mxu0 0
        %285 = vmatpush1.bf16.msra.mxu0 0
        %286 = vmatprep.mubr.bf16.mxu0 0
        %287 = vmatmul.mubr.bf16.gmra.mrb[0].mxu0 %v249
        %v288 = vpop.f32.mrb[0].mxu0
        %v289 = vadd.f32 0.0, %v288
        %v290 = vpop.f32.mrb[0].mxu0
        %v291 = vadd.f32 0.0, %v290
        %v292 = vpop.f32.mrb[0].mxu0
        %v293 = vadd.f32 0.0, %v292
        %v294 = vpop.f32.mrb[0].mxu0
        %v295 = vadd.f32 0.0, %v294
        %296 = vmatprep.mubr.bf16.mxu0 0
        %297 = vmatmul.mubr.bf16.gmra.mrb[0].mxu0 %v252
        %v298 = vpop.f32.mrb[0].mxu0
        %v299 = vadd.f32 0.0, %v298
        %v300 = vpop.f32.mrb[0].mxu0
        %v301 = vadd.f32 0.0, %v300
        %v302 = vpop.f32.mrb[0].mxu0
        %v303 = vadd.f32 0.0, %v302
        %v304 = vpop.f32.mrb[0].mxu0
        %v305 = vadd.f32 0.0, %v304
        %306 = vdwg.mxu0
        %307 = vst [vmem:[%s134] sm:$0xff] %v289
        %308 = vst [vmem:[%s134 + $0x8] sm:$0xff] %v291
        %309 = vst [vmem:[%s134 + $0x10] sm:$0xff] %v293
        %310 = vst [vmem:[%s134 + $0x18] sm:$0xff] %v295
        %311 = vst [vmem:[%s134 + $0x20] sm:$0xff] %v299
        %312 = vst [vmem:[%s134 + $0x28] sm:$0xff] %v301
        %313 = vst [vmem:[%s134 + $0x30] sm:$0xff] %v303
        %314 = vst [vmem:[%s134 + $0x38] sm:$0xff] %v305
        %s315 = sand.u32 %s52, 1
        %s316 = scalar_lea.sflag [#allocation4], %s315
        %s317 = sand.u32 %s52, 1
        %s318 = smul.addr %s317, 64
        %s319 = scalar_lea.vmem [#allocation5], %s318
        // Predicated region
        $region29: #{tpu_custom_call.1} parent=23 // pred_check
          %p320 = pneg %p62
        $region30: #{tpu_custom_call.1} parent=23 // pred_check_branch
          %322 = sbr.rel (%p320) target = $region32
        $region31: #{tpu_custom_call.1} parent=23 // pred_region
          %s324 = ssub.s32 1024, 1024
          %325 = vsyncadd %s316, %s324
          %s326 = smul.addr %s18, 8
          %s327 = smul.addr %s326, 128
          %s328 = scalar_lea.hbm %s1, %s327
          %s329 = sshll.u32 %s319, 4
          %s330 = int_to_ptr.vmem [resolvable:$true] %s329
          %335 = dma.vmem_to_hbm [thread:$0]  %s330, 1024, %s328, %s316, 256, 256, 16
        $region32: #{tpu_custom_call.1} parent=23 // pred_fallthru
          _
      $region24: #{tpu_custom_call.1} parent=5 // pred_fallthru
        _
      %p336 = scmp.le.s32.totalorder 2, %s13
      // Predicated region
      $region33: #{tpu_custom_call.1} parent=5 // pred_check
        %p337 = pneg %p336
      $region34: #{tpu_custom_call.1} parent=5 // pred_check_branch
        %339 = sbr.rel (%p337) target = $region36
      $region35: #{tpu_custom_call.1} parent=5 // pred_region
        %s340 = ssub.s32 %s13, 2
        // Predicated region
        $region37: #{tpu_custom_call.1} parent=35 // pred_check
          %p341 = pneg %p68
        $region38: #{tpu_custom_call.1} parent=35 // pred_check_branch
          %343 = sbr.rel (%p341) target = $region40
        $region39: #{tpu_custom_call.1} parent=35 // pred_region
          %s344 = sand.u32 %s53, 1
          %s345 = scalar_lea.sflag [#allocation4], %s344
          %s346 = sand.u32 %s53, 1
          %s347 = smul.addr %s346, 64
          %s348 = scalar_lea.vmem [#allocation5], %s347
          %349 = dma.done %s345, 1024
        $region40: #{tpu_custom_call.1} parent=35 // pred_fallthru
          _
      $region36: #{tpu_custom_call.1} parent=5 // pred_fallthru
        _
    $region6: #{tpu_custom_call.1} parent=1 // loop_footer
      %s17 = sadd.s32 1, %s13
    $region7: #{tpu_custom_call.1} parent=1 // loop_footer_branch
      %12 = sbr.rel target = $region3
    $region8: #{tpu_custom_call.1} parent=1 // loop_exit
      _
    %350 = vsyncpa [#allocation3], 1
    %s351 = scalar_lea.sflag [#allocation3], 1
    %352 = vsyncpa %s351, 1
    %353 = vsyncpa [#allocation4], 1
    %s354 = scalar_lea.sflag [#allocation4], 1
    %355 = vsyncpa %s354, 1

</llo_original>
